<compile_context>
chip_gen: v7x
topology: tpu7x:2x2x1
jax: 0.10.0
libtpu: 0.0.40
codegen_flags: <defaults>
</compile_context>

<pallas_src>
import jax
import jax.numpy as jnp
from jax.experimental import pallas as pl
from jax.experimental.pallas import tpu as pltpu

LANE = 128


def _round_up(n, m):
    return ((n + m - 1) // m) * m


def _pad2(a, rows, cols):
    return jnp.pad(a, ((0, rows - a.shape[0]), (0, cols - a.shape[1])))


def mlp_kernel(x_ref, w1_ref, b1_ref, w2_ref, b2_ref,
               w3_ref, b3_ref, w4_ref, b4_ref, o_ref):
    # x arrives f32 (narrow, unpadded K); cast to bf16 only for the MXU matmuls.
    x = x_ref[...].astype(jnp.bfloat16)
    y = jnp.dot(x, w1_ref[...],
                preferred_element_type=jnp.float32) + b1_ref[...]
    y = jnp.maximum(y, 0.0)                                   # relu (f32)
    y = jnp.dot(y.astype(jnp.bfloat16), w2_ref[...],
                preferred_element_type=jnp.float32) + b2_ref[...]
    y = jax.nn.sigmoid(y)                                     # sigmoid (f32, EUP)
    y = jnp.dot(y.astype(jnp.bfloat16), w3_ref[...],
                preferred_element_type=jnp.float32) + b3_ref[...]
    y = jnp.maximum(y, 0.0)                                   # relu (f32)
    # TODO(synk): Dropout(p=0.1) implemented as identity (eval-mode semantics);
    # training-mode dropout would need pltpu.prng_seed/prng_random_bits masking.
    y = jnp.dot(y.astype(jnp.bfloat16), w4_ref[...],
                preferred_element_type=jnp.float32) + b4_ref[...]
    o_ref[...] = y.astype(o_ref.dtype)                        # narrow f32 store


def prepare_params(params):
    """One-time weight/bias padding + bf16 cast (hoisted out of the forward pass).

    Hidden dims are zero-padded to 128 lanes so intermediate matmuls / stores are
    lane-dense; padding is annihilated exactly (sigmoid(0)=0.5 on padded layer-2
    lanes hits zero-padded rows of w3).  The input K (in_size) and output N
    (out_size) are left unpadded — those blocks equal the full array dims.
    """
    (w1, b1), (w2, b2), (w3, b3), (w4, b4) = params
    in_size = w1.shape[0]
    h1_p = _round_up(w1.shape[1], LANE)
    h2_p = _round_up(w2.shape[1], LANE)
    h3_p = _round_up(w3.shape[1], LANE)
    out_size = w4.shape[1]

    w1p = _pad2(w1, in_size, h1_p).astype(jnp.bfloat16)
    w2p = _pad2(w2, h1_p, h2_p).astype(jnp.bfloat16)
    w3p = _pad2(w3, h2_p, h3_p).astype(jnp.bfloat16)
    w4p = _pad2(w4, h3_p, out_size).astype(jnp.bfloat16)
    b1p = _pad2(b1, 1, h1_p).astype(jnp.float32)
    b2p = _pad2(b2, 1, h2_p).astype(jnp.float32)
    b3p = _pad2(b3, 1, h3_p).astype(jnp.float32)
    b4p = b4.astype(jnp.float32)
    return (w1p, b1p, w2p, b2p, w3p, b3p, w4p, b4p)


def _choose_tile_b(batch):
    # Small batches: a single full-batch block (block dim == full array dim is
    # always a legal BlockSpec shape, no padding / raggedness at all).
    if batch <= 32:
        return batch
    # Large tiles amortize the ~0.35 us per-grid-step overhead (measured 256->63%,
    # 1024->86% of HBM roofline); cap at ~batch/2 so there are >=2 grid steps and
    # the "parallel" batch axis lands on both TensorCores on v7x.  Even at 2048
    # rows the double-buffered footprint is a few MiB, far under v7x's 64 MiB VMEM.
    return min(2048, _round_up((batch + 1) // 2, 16))


def net_forward(x, prepared):
    w1p, b1p, w2p, b2p, w3p, b3p, w4p, b4p = prepared
    batch, in_size = x.shape
    h1_p, h2_p, h3_p = w1p.shape[1], w2p.shape[1], w3p.shape[1]
    out_size = w4p.shape[1]

    tile_b = _choose_tile_b(batch)
    grid = (pl.cdiv(batch, tile_b),)        # ragged final tile is masked by Pallas

    const = lambda i: (0, 0)                # weights/biases stay VMEM-resident
    return pl.pallas_call(
        mlp_kernel,
        out_shape=jax.ShapeDtypeStruct((batch, out_size), jnp.float32),
        grid=grid,
        in_specs=[
            pl.BlockSpec((tile_b, in_size), lambda i: (i, 0)),   # x, unpadded K
            pl.BlockSpec((in_size, h1_p), const), pl.BlockSpec((1, h1_p), const),
            pl.BlockSpec((h1_p, h2_p), const), pl.BlockSpec((1, h2_p), const),
            pl.BlockSpec((h2_p, h3_p), const), pl.BlockSpec((1, h3_p), const),
            pl.BlockSpec((h3_p, out_size), const), pl.BlockSpec((1, out_size), const),
        ],
        out_specs=pl.BlockSpec((tile_b, out_size), lambda i: (i, 0)),  # narrow store
        compiler_params=pltpu.CompilerParams(
            dimension_semantics=("parallel",),        # megacore sharding on v7x
            vmem_limit_bytes=32 * 1024 * 1024,
        ),
    )(x, w1p, b1p, w2p, b2p, w3p, b3p, w4p, b4p)


def init_linear(key, fan_in, fan_out):
    # Mimic PyTorch nn.Linear default init: U(-1/sqrt(fan_in), 1/sqrt(fan_in))
    kw, kb = jax.random.split(key)
    bound = 1.0 / jnp.sqrt(jnp.float32(fan_in))
    w = jax.random.uniform(kw, (fan_in, fan_out), jnp.float32, -bound, bound)
    b = jax.random.uniform(kb, (1, fan_out), jnp.float32, -bound, bound)
    return w, b


def reference_forward(x, params, dot_dtype=jnp.float32):
    (w1, b1), (w2, b2), (w3, b3), (w4, b4) = params

    def dot(a, b):
        return jnp.dot(a.astype(dot_dtype), b.astype(dot_dtype),
                       preferred_element_type=jnp.float32)

    y = jnp.maximum(dot(x, w1) + b1, 0.0)
    y = jax.nn.sigmoid(dot(y, w2) + b2)
    y = jnp.maximum(dot(y, w3) + b3, 0.0)
    return dot(y, w4) + b4


if __name__ == "__main__":
    batch_size = 8
    input_size = 16
    hidden_size = 32
    output_size = 8

    key = jax.random.PRNGKey(0)
    kx, k1, k2, k3, k4 = jax.random.split(key, 5)

    x = jax.random.normal(kx, (batch_size, input_size), jnp.float32)
    params = (
        init_linear(k1, input_size, hidden_size),
        init_linear(k2, hidden_size, hidden_size),
        init_linear(k3, hidden_size, hidden_size),
        init_linear(k4, hidden_size, output_size),
    )

    prepared = prepare_params(params)       # one-time padding / bf16 cast
    out = net_forward(x, prepared)
    jax.block_until_ready(out)
    assert out.shape == (batch_size, output_size)

    # Tight check against a bf16-matmul reference (same MXU dtype path).
    ref_bf16 = reference_forward(x, params, dot_dtype=jnp.bfloat16)
    assert jnp.allclose(out, ref_bf16, atol=2e-3, rtol=2e-3)

    # Loose check against the full-f32 reference (module semantics).
    ref_f32 = reference_forward(x, params, dot_dtype=jnp.float32)
    assert jnp.allclose(out, ref_f32, atol=3e-2, rtol=3e-2)

    print("KERNEL_OK")
</pallas_src>

<mosaic_0001>
module attributes {stable_mosaic.version = 11 : i64} {
  func.func @mlp_kernel(%arg0: i32, %arg1: memref<8x16xf32, #tpu.memory_space<vmem>>, %arg2: memref<16x128xbf16, #tpu.memory_space<vmem>>, %arg3: memref<1x128xf32, #tpu.memory_space<vmem>>, %arg4: memref<128x128xbf16, #tpu.memory_space<vmem>>, %arg5: memref<1x128xf32, #tpu.memory_space<vmem>>, %arg6: memref<128x128xbf16, #tpu.memory_space<vmem>>, %arg7: memref<1x128xf32, #tpu.memory_space<vmem>>, %arg8: memref<128x8xbf16, #tpu.memory_space<vmem>>, %arg9: memref<1x8xf32, #tpu.memory_space<vmem>>, %arg10: memref<8x8xf32, #tpu.memory_space<vmem>>) attributes {dimension_semantics = [#tpu.dimension_semantics<parallel>], iteration_bounds = array<i64: 1>, scalar_prefetch = 0 : i64, scratch_operands = 0 : i64, tpu.core_type = #tpu.core_type<tc>, window_params = [{transform_indices = @transform_0, window_bounds = array<i64: 8, 16>}, {pipeline_mode = #tpu.pipeline_mode<synchronous>, transform_indices = @transform_1, window_bounds = array<i64: 16, 128>}, {pipeline_mode = #tpu.pipeline_mode<synchronous>, transform_indices = @transform_2, window_bounds = array<i64: 1, 128>}, {pipeline_mode = #tpu.pipeline_mode<synchronous>, transform_indices = @transform_3, window_bounds = array<i64: 128, 128>}, {pipeline_mode = #tpu.pipeline_mode<synchronous>, transform_indices = @transform_4, window_bounds = array<i64: 1, 128>}, {pipeline_mode = #tpu.pipeline_mode<synchronous>, transform_indices = @transform_5, window_bounds = array<i64: 128, 128>}, {pipeline_mode = #tpu.pipeline_mode<synchronous>, transform_indices = @transform_6, window_bounds = array<i64: 1, 128>}, {pipeline_mode = #tpu.pipeline_mode<synchronous>, transform_indices = @transform_7, window_bounds = array<i64: 128, 8>}, {pipeline_mode = #tpu.pipeline_mode<synchronous>, transform_indices = @transform_8, window_bounds = array<i64: 1, 8>}, {transform_indices = @transform_9, window_bounds = array<i64: 8, 8>}]} {
    %c0 = arith.constant 0 : index
    %c0_0 = arith.constant 0 : index
    %0 = vector.load %arg1[%c0, %c0_0] : memref<8x16xf32, #tpu.memory_space<vmem>>, vector<8x16xf32>
    %1 = arith.truncf %0 : vector<8x16xf32> to vector<8x16xbf16>
    %c0_1 = arith.constant 0 : index
    %c0_2 = arith.constant 0 : index
    %2 = vector.load %arg2[%c0_1, %c0_2] : memref<16x128xbf16, #tpu.memory_space<vmem>>, vector<16x128xbf16>
    %cst = arith.constant dense<0.000000e+00> : vector<8x128xf32>
    %3 = tpu.matmul %1, %2, %cst {dimension_numbers = #tpu.dot_dimension_numbers<[1], [0], [0], [1], [0, 0, 1, 1], [], []>} : vector<8x16xbf16>, vector<16x128xbf16>, vector<8x128xf32> -> vector<8x128xf32>
    %c0_3 = arith.constant 0 : index
    %c0_4 = arith.constant 0 : index
    %4 = vector.load %arg3[%c0_3, %c0_4] : memref<1x128xf32, #tpu.memory_space<vmem>>, vector<1x128xf32>
    %5 = vector.broadcast %4 : vector<1x128xf32> to vector<8x128xf32>
    %6 = arith.addf %3, %5 : vector<8x128xf32>
    %cst_5 = arith.constant 0.000000e+00 : f32
    %7 = vector.broadcast %cst_5 : f32 to vector<8x128xf32>
    %8 = arith.maximumf %6, %7 : vector<8x128xf32>
    %9 = arith.truncf %8 : vector<8x128xf32> to vector<8x128xbf16>
    %c0_6 = arith.constant 0 : index
    %c0_7 = arith.constant 0 : index
    %10 = vector.load %arg4[%c0_6, %c0_7] : memref<128x128xbf16, #tpu.memory_space<vmem>>, vector<128x128xbf16>
    %cst_8 = arith.constant dense<0.000000e+00> : vector<8x128xf32>
    %11 = tpu.matmul %9, %10, %cst_8 {dimension_numbers = #tpu.dot_dimension_numbers<[1], [0], [0], [1], [0, 0, 1, 1], [], []>} : vector<8x128xbf16>, vector<128x128xbf16>, vector<8x128xf32> -> vector<8x128xf32>
    %c0_9 = arith.constant 0 : index
    %c0_10 = arith.constant 0 : index
    %12 = vector.load %arg5[%c0_9, %c0_10] : memref<1x128xf32, #tpu.memory_space<vmem>>, vector<1x128xf32>
    %13 = vector.broadcast %12 : vector<1x128xf32> to vector<8x128xf32>
    %14 = arith.addf %11, %13 : vector<8x128xf32>
    %15 = arith.negf %14 : vector<8x128xf32>
    %16 = math.exp %15 : vector<8x128xf32>
    %cst_11 = arith.constant 1.000000e+00 : f32
    %17 = vector.broadcast %cst_11 : f32 to vector<8x128xf32>
    %18 = arith.addf %17, %16 : vector<8x128xf32>
    %19 = arith.divf %17, %18 : vector<8x128xf32>
    %20 = arith.truncf %19 : vector<8x128xf32> to vector<8x128xbf16>
    %c0_12 = arith.constant 0 : index
    %c0_13 = arith.constant 0 : index
    %21 = vector.load %arg6[%c0_12, %c0_13] : memref<128x128xbf16, #tpu.memory_space<vmem>>, vector<128x128xbf16>
    %cst_14 = arith.constant dense<0.000000e+00> : vector<8x128xf32>
    %22 = tpu.matmul %20, %21, %cst_14 {dimension_numbers = #tpu.dot_dimension_numbers<[1], [0], [0], [1], [0, 0, 1, 1], [], []>} : vector<8x128xbf16>, vector<128x128xbf16>, vector<8x128xf32> -> vector<8x128xf32>
    %c0_15 = arith.constant 0 : index
    %c0_16 = arith.constant 0 : index
    %23 = vector.load %arg7[%c0_15, %c0_16] : memref<1x128xf32, #tpu.memory_space<vmem>>, vector<1x128xf32>
    %24 = vector.broadcast %23 : vector<1x128xf32> to vector<8x128xf32>
    %25 = arith.addf %22, %24 : vector<8x128xf32>
    %cst_17 = arith.constant 0.000000e+00 : f32
    %26 = vector.broadcast %cst_17 : f32 to vector<8x128xf32>
    %27 = arith.maximumf %25, %26 : vector<8x128xf32>
    %28 = arith.truncf %27 : vector<8x128xf32> to vector<8x128xbf16>
    %c0_18 = arith.constant 0 : index
    %c0_19 = arith.constant 0 : index
    %29 = vector.load %arg8[%c0_18, %c0_19] : memref<128x8xbf16, #tpu.memory_space<vmem>>, vector<128x8xbf16>
    %cst_20 = arith.constant dense<0.000000e+00> : vector<8x8xf32>
    %30 = tpu.matmul %28, %29, %cst_20 {dimension_numbers = #tpu.dot_dimension_numbers<[1], [0], [0], [1], [0, 0, 1, 1], [], []>} : vector<8x128xbf16>, vector<128x8xbf16>, vector<8x8xf32> -> vector<8x8xf32>
    %c0_21 = arith.constant 0 : index
    %c0_22 = arith.constant 0 : index
    %31 = vector.load %arg9[%c0_21, %c0_22] : memref<1x8xf32, #tpu.memory_space<vmem>>, vector<1x8xf32>
    %32 = vector.broadcast %31 : vector<1x8xf32> to vector<8x8xf32>
    %33 = arith.addf %30, %32 : vector<8x8xf32>
    %c0_23 = arith.constant 0 : index
    %c0_24 = arith.constant 0 : index
    %34 = vector.load %arg10[%c0_23, %c0_24] : memref<8x8xf32, #tpu.memory_space<vmem>>, vector<8x8xf32>
    tpu.vector_store %arg10[%c0_23, %c0_24], %33 {strides = array<i32>} : memref<8x8xf32, #tpu.memory_space<vmem>>, vector<8x8xf32>,
    return
  }
  func.func @transform_0(%arg0: i32) -> (i32, i32) {
    %c0_i32 = arith.constant 0 : i32
    %c0_i32_0 = arith.constant 0 : i32
    return %arg0, %c0_i32 : i32, i32
  }
  func.func @transform_1(%arg0: i32) -> (i32, i32) {
    %c0_i32 = arith.constant 0 : i32
    %c0_i32_0 = arith.constant 0 : i32
    %c0_i32_1 = arith.constant 0 : i32
    return %c0_i32, %c0_i32_0 : i32, i32
  }
  func.func @transform_2(%arg0: i32) -> (i32, i32) {
    %c0_i32 = arith.constant 0 : i32
    %c0_i32_0 = arith.constant 0 : i32
    %c0_i32_1 = arith.constant 0 : i32
    return %c0_i32, %c0_i32_0 : i32, i32
  }
  func.func @transform_3(%arg0: i32) -> (i32, i32) {
    %c0_i32 = arith.constant 0 : i32
    %c0_i32_0 = arith.constant 0 : i32
    %c0_i32_1 = arith.constant 0 : i32
    return %c0_i32, %c0_i32_0 : i32, i32
  }
  func.func @transform_4(%arg0: i32) -> (i32, i32) {
    %c0_i32 = arith.constant 0 : i32
    %c0_i32_0 = arith.constant 0 : i32
    %c0_i32_1 = arith.constant 0 : i32
    return %c0_i32, %c0_i32_0 : i32, i32
  }
  func.func @transform_5(%arg0: i32) -> (i32, i32) {
    %c0_i32 = arith.constant 0 : i32
    %c0_i32_0 = arith.constant 0 : i32
    %c0_i32_1 = arith.constant 0 : i32
    return %c0_i32, %c0_i32_0 : i32, i32
  }
  func.func @transform_6(%arg0: i32) -> (i32, i32) {
    %c0_i32 = arith.constant 0 : i32
    %c0_i32_0 = arith.constant 0 : i32
    %c0_i32_1 = arith.constant 0 : i32
    return %c0_i32, %c0_i32_0 : i32, i32
  }
  func.func @transform_7(%arg0: i32) -> (i32, i32) {
    %c0_i32 = arith.constant 0 : i32
    %c0_i32_0 = arith.constant 0 : i32
    %c0_i32_1 = arith.constant 0 : i32
    return %c0_i32, %c0_i32_0 : i32, i32
  }
  func.func @transform_8(%arg0: i32) -> (i32, i32) {
    %c0_i32 = arith.constant 0 : i32
    %c0_i32_0 = arith.constant 0 : i32
    %c0_i32_1 = arith.constant 0 : i32
    return %c0_i32, %c0_i32_0 : i32, i32
  }
  func.func @transform_9(%arg0: i32) -> (i32, i32) {
    %c0_i32 = arith.constant 0 : i32
    %c0_i32_0 = arith.constant 0 : i32
    return %arg0, %c0_i32 : i32, i32
  }
}

</mosaic_0001>

<llo_original>
// kernel: tpu_custom_call.1
$region0: #{tpu_custom_call.1}
  #allocation0 [shape = 'u32[]', space=smem, size = 0x4, offset = 0x4, fixed_abs, tag = 'smem constant byte address 0x4 - core index']
  #allocation1 [shape = 'u32[144,128]{1,0:T(1,128)}', space=vmem, size = 0x12000, scoped, tag = 'internal scratch']
  %s0 = inlined_call_operand.vmem [shape: f32[8,16], index: 0, kind: input, shape index: {}]
  %s1 = inlined_call_operand.hbm [shape: bf16[16,128], index: 1, kind: input, shape index: {}]
  %s2 = inlined_call_operand.vmem [shape: f32[1,128], index: 2, kind: input, shape index: {}]
  %s3 = inlined_call_operand.vmem [shape: bf16[128,128], index: 3, kind: input, shape index: {}]
  %s4 = inlined_call_operand.vmem [shape: f32[1,128], index: 4, kind: input, shape index: {}]
  %s5 = inlined_call_operand.hbm [shape: bf16[128,128], index: 5, kind: input, shape index: {}]
  %s6 = inlined_call_operand.vmem [shape: f32[1,128], index: 6, kind: input, shape index: {}]
  %s7 = inlined_call_operand.vmem [shape: bf16[128,8], index: 7, kind: input, shape index: {}]
  %s8 = inlined_call_operand.vmem [shape: f32[1,8], index: 8, kind: input, shape index: {}]
  %s9 = inlined_call_operand.hbm [shape: f32[8,8], index: 9, kind: output, shape index: {}]
  %s10 = sld [smem:[#allocation0]]
  $region54: #{tpu_custom_call.1} parent=0
    _
  %s12 = ssub.s32 1, %s10
  %s13 = scalar_select 0, %s12, %s10
  $region1: #{tpu_custom_call.1} parent=0
    #allocation2 [shape = 'u8[4096]{0}', space=vmem, size = 0x1000, scoped, tag = 'input window, operand 1, single buffered']
    #allocation3 [shape = 's32[1]{0}', space=sflag, size = 0x4, scoped, tag = 'scoped memory for tpu_custom_call.1']
    #allocation4 [shape = 's32[1]{0}', space=sflag, size = 0x4, scoped, tag = 'scoped memory for tpu_custom_call.1']
    #allocation5 [shape = 'u8[32768]{0}', space=vmem, size = 0x8000, scoped, tag = 'input window, operand 5, single buffered']
    #allocation6 [shape = 's32[1]{0}', space=sflag, size = 0x4, scoped, tag = 'scoped memory for tpu_custom_call.1']
    #allocation7 [shape = 'u8[4096]{0}', space=vmem, size = 0x1000, scoped, tag = 'output window, operand 0, single buffered']
    %14 = vsyncpa [#allocation3], 0
    %15 = vsyncpa [#allocation6], 0
    %16 = vsyncpa [#allocation4], 0
    // Predicated region
    $region2: #{tpu_custom_call.1} parent=1 // pred_check
      _
    $region3: #{tpu_custom_call.1} parent=1 // pred_check_branch
      %18 = sbr.rel (0) target = $region5
    $region4: #{tpu_custom_call.1} parent=1 // pred_region
      _
    $region5: #{tpu_custom_call.1} parent=1 // pred_fallthru
      _
    // Predicated region
    $region6: #{tpu_custom_call.1} parent=1 // pred_check
      _
    $region7: #{tpu_custom_call.1} parent=1 // pred_check_branch
      %20 = sbr.rel (0) target = $region9
    $region8: #{tpu_custom_call.1} parent=1 // pred_region
      %s22 = ssub.s32 128, 128
      %23 = vsyncadd [#allocation3], %s22
      %s24 = sshll.u32 [#allocation2], 4
      %s25 = int_to_ptr.vmem [resolvable:$true] %s24
      %30 = dma.hbm_to_vmem [thread:$0]  %s1, 128, %s25, [#allocation3], 64, 64, 4
    $region9: #{tpu_custom_call.1} parent=1 // pred_fallthru
      _
    // Predicated region
    $region10: #{tpu_custom_call.1} parent=1 // pred_check
      _
    $region11: #{tpu_custom_call.1} parent=1 // pred_check_branch
      %32 = sbr.rel (0) target = $region13
    $region12: #{tpu_custom_call.1} parent=1 // pred_region
      _
    $region13: #{tpu_custom_call.1} parent=1 // pred_fallthru
      _
    // Predicated region
    $region14: #{tpu_custom_call.1} parent=1 // pred_check
      _
    $region15: #{tpu_custom_call.1} parent=1 // pred_check_branch
      %34 = sbr.rel (0) target = $region17
    $region16: #{tpu_custom_call.1} parent=1 // pred_region
      _
    $region17: #{tpu_custom_call.1} parent=1 // pred_fallthru
      _
    // Predicated region
    $region18: #{tpu_custom_call.1} parent=1 // pred_check
      _
    $region19: #{tpu_custom_call.1} parent=1 // pred_check_branch
      %36 = sbr.rel (0) target = $region21
    $region20: #{tpu_custom_call.1} parent=1 // pred_region
      _
    $region21: #{tpu_custom_call.1} parent=1 // pred_fallthru
      _
    // Predicated region
    $region22: #{tpu_custom_call.1} parent=1 // pred_check
      _
    $region23: #{tpu_custom_call.1} parent=1 // pred_check_branch
      %38 = sbr.rel (0) target = $region25
    $region24: #{tpu_custom_call.1} parent=1 // pred_region
      %s40 = ssub.s32 1024, 1024
      %41 = vsyncadd [#allocation6], %s40
      %s42 = sshll.u32 [#allocation5], 4
      %s43 = int_to_ptr.vmem [resolvable:$true] %s42
      %48 = dma.hbm_to_vmem [thread:$0]  %s5, 1024, %s43, [#allocation6], 64, 64, 4
    $region25: #{tpu_custom_call.1} parent=1 // pred_fallthru
      _
    // Predicated region
    $region26: #{tpu_custom_call.1} parent=1 // pred_check
      _
    $region27: #{tpu_custom_call.1} parent=1 // pred_check_branch
      %50 = sbr.rel (0) target = $region29
    $region28: #{tpu_custom_call.1} parent=1 // pred_region
      _
    $region29: #{tpu_custom_call.1} parent=1 // pred_fallthru
      _
    // Predicated region
    $region30: #{tpu_custom_call.1} parent=1 // pred_check
      _
    $region31: #{tpu_custom_call.1} parent=1 // pred_check_branch
      %52 = sbr.rel (0) target = $region33
    $region32: #{tpu_custom_call.1} parent=1 // pred_region
      _
    $region33: #{tpu_custom_call.1} parent=1 // pred_fallthru
      _
    // Predicated region
    $region34: #{tpu_custom_call.1} parent=1 // pred_check
      _
    $region35: #{tpu_custom_call.1} parent=1 // pred_check_branch
      %54 = sbr.rel (0) target = $region37
    $region36: #{tpu_custom_call.1} parent=1 // pred_region
      _
    $region37: #{tpu_custom_call.1} parent=1 // pred_fallthru
      _
    // Predicated region
    $region38: #{tpu_custom_call.1} parent=1 // pred_check
      _
    $region39: #{tpu_custom_call.1} parent=1 // pred_check_branch
      %56 = sbr.rel (0) target = $region41
    $region40: #{tpu_custom_call.1} parent=1 // pred_region
      %57 = dma.done [#allocation3], 128
    $region41: #{tpu_custom_call.1} parent=1 // pred_fallthru
      _
    // Predicated region
    $region42: #{tpu_custom_call.1} parent=1 // pred_check
      _
    $region43: #{tpu_custom_call.1} parent=1 // pred_check_branch
      %59 = sbr.rel (0) target = $region45
    $region44: #{tpu_custom_call.1} parent=1 // pred_region
      %60 = dma.done [#allocation6], 1024
    $region45: #{tpu_custom_call.1} parent=1 // pred_fallthru
      _
    %v62 = vld [vmem:[%s0] sm:$0xff]
    %v63 = vpack.c.bf16 %v62, %v62
    %v64 = vld [vmem:[#allocation2] sm:$0xf]
    %v65 = vld [vmem:[#allocation2 + $0x4] sm:$0xf]
    %v66 = vld [vmem:[%s2] sm:$0x1]
    %v68 = vlaneseq
    %v69 = vshrl.u32 %v68, 7
    %v70 = vsub.s32 0, %v69
    %v71 = vrot.slane %v66, %v70
    %v75 = vunpack.c.l.b16 %v64
    %v76 = vunpack.c.l.b16 %v65
    %v77 = vpack.c.b16 %v76, %v75
    %vm79 = vcmask 130048
    %v81 = vsel %vm79, %v63, 0
    %83 = vmatprep.subr.bf16.mxu0 0
    %84 = vmatpush1.bf16.msra.mxu0 %v77
    %85 = vmatprep.subr.bf16.mxu0 0
    %86 = vmatpush1.bf16.msra.mxu0 0
    %87 = vmatprep.subr.bf16.mxu0 0
    %88 = vmatpush1.bf16.msra.mxu0 0
    %89 = vmatprep.subr.bf16.mxu0 0
    %90 = vmatpush1.bf16.msra.mxu0 0
    %91 = vmatprep.subr.bf16.mxu0 0
    %92 = vmatpush1.bf16.msra.mxu0 0
    %93 = vmatprep.subr.bf16.mxu0 0
    %94 = vmatpush1.bf16.msra.mxu0 0
    %95 = vmatprep.subr.bf16.mxu0 0
    %96 = vmatpush1.bf16.msra.mxu0 0
    %97 = vmatprep.subr.bf16.mxu0 0
    %98 = vmatpush1.bf16.msra.mxu0 0
    %99 = vmatprep.subr.bf16.mxu0 0
    %100 = vmatpush1.bf16.msra.mxu0 0
    %101 = vmatprep.subr.bf16.mxu0 0
    %102 = vmatpush1.bf16.msra.mxu0 0
    %103 = vmatprep.subr.bf16.mxu0 0
    %104 = vmatpush1.bf16.msra.mxu0 0
    %105 = vmatprep.subr.bf16.mxu0 0
    %106 = vmatpush1.bf16.msra.mxu0 0
    %107 = vmatprep.subr.bf16.mxu0 0
    %108 = vmatpush1.bf16.msra.mxu0 0
    %109 = vmatprep.subr.bf16.mxu0 0
    %110 = vmatpush1.bf16.msra.mxu0 0
    %111 = vmatprep.subr.bf16.mxu0 0
    %112 = vmatpush1.bf16.msra.mxu0 0
    %113 = vmatprep.subr.bf16.mxu0 0
    %114 = vmatpush1.bf16.msra.mxu0 0
    %115 = vmatprep.mubr.bf16.mxu0 0
    %116 = vmatmul.mubr.bf16.gmra.mrb[0].mxu0 %v81
    %v117 = vpop.f32.mrb[0].mxu0
    %v118 = vadd.f32 %v71, %v117
    %v119 = vpop.f32.mrb[0].mxu0
    %v120 = vpop.f32.mrb[0].mxu0
    %v121 = vpop.f32.mrb[0].mxu0
    %122 = vdwg.mxu0
    %v123 = vmax.f32 %v118, 0.0
    %v124 = vpack.c.bf16 %v123, %v123
    %v125 = vld [vmem:[%s3] sm:$0xf]
    %v126 = vld [vmem:[%s3 + $0x4] sm:$0xf]
    %v127 = vld [vmem:[%s3 + $0x8] sm:$0xf]
    %v128 = vld [vmem:[%s3 + $0xc] sm:$0xf]
    %v129 = vld [vmem:[%s3 + $0x10] sm:$0xf]
    %v130 = vld [vmem:[%s3 + $0x14] sm:$0xf]
    %v131 = vld [vmem:[%s3 + $0x18] sm:$0xf]
    %v132 = vld [vmem:[%s3 + $0x1c] sm:$0xf]
    %v133 = vld [vmem:[%s3 + $0x20] sm:$0xf]
    %v134 = vld [vmem:[%s3 + $0x24] sm:$0xf]
    %v135 = vld [vmem:[%s3 + $0x28] sm:$0xf]
    %v136 = vld [vmem:[%s3 + $0x2c] sm:$0xf]
    %v137 = vld [vmem:[%s3 + $0x30] sm:$0xf]
    %v138 = vld [vmem:[%s3 + $0x34] sm:$0xf]
    %v139 = vld [vmem:[%s3 + $0x38] sm:$0xf]
    %v140 = vld [vmem:[%s3 + $0x3c] sm:$0xf]
    %v141 = vld [vmem:[%s4] sm:$0x1]
    %v143 = vlaneseq
    %v144 = vshrl.u32 %v143, 7
    %v145 = vsub.s32 0, %v144
    %v146 = vrot.slane %v141, %v145
    %v164 = vunpack.c.l.b16 %v125
    %v165 = vunpack.c.l.b16 %v126
    %v166 = vunpack.c.l.b16 %v127
    %v167 = vunpack.c.l.b16 %v128
    %v168 = vunpack.c.l.b16 %v129
    %v169 = vunpack.c.l.b16 %v130
    %v170 = vunpack.c.l.b16 %v131
    %v171 = vunpack.c.l.b16 %v132
    %v172 = vunpack.c.l.b16 %v133
    %v173 = vunpack.c.l.b16 %v134
    %v174 = vunpack.c.l.b16 %v135
    %v175 = vunpack.c.l.b16 %v136
    %v176 = vunpack.c.l.b16 %v137
    %v177 = vunpack.c.l.b16 %v138
    %v178 = vunpack.c.l.b16 %v139
    %v179 = vunpack.c.l.b16 %v140
    %v180 = vpack.c.b16 %v165, %v164
    %v181 = vpack.c.b16 %v167, %v166
    %v182 = vpack.c.b16 %v169, %v168
    %v183 = vpack.c.b16 %v171, %v170
    %v184 = vpack.c.b16 %v173, %v172
    %v185 = vpack.c.b16 %v175, %v174
    %v186 = vpack.c.b16 %v177, %v176
    %v187 = vpack.c.b16 %v179, %v178
    %196 = vmatprep.subr.bf16.mxu0 0
    %197 = vmatpush1.bf16.msra.mxu0 %v180
    %198 = vmatprep.subr.bf16.mxu0 0
    %199 = vmatpush1.bf16.msra.mxu0 %v181
    %200 = vmatprep.subr.bf16.mxu0 0
    %201 = vmatpush1.bf16.msra.mxu0 %v182
    %202 = vmatprep.subr.bf16.mxu0 0
    %203 = vmatpush1.bf16.msra.mxu0 %v183
    %204 = vmatprep.subr.bf16.mxu0 0
    %205 = vmatpush1.bf16.msra.mxu0 %v184
    %206 = vmatprep.subr.bf16.mxu0 0
    %207 = vmatpush1.bf16.msra.mxu0 %v185
    %208 = vmatprep.subr.bf16.mxu0 0
    %209 = vmatpush1.bf16.msra.mxu0 %v186
    %210 = vmatprep.subr.bf16.mxu0 0
    %211 = vmatpush1.bf16.msra.mxu0 %v187
    %212 = vmatprep.subr.bf16.mxu0 0
    %213 = vmatpush1.bf16.msra.mxu0 0
    %214 = vmatprep.subr.bf16.mxu0 0
    %215 = vmatpush1.bf16.msra.mxu0 0
    %216 = vmatprep.subr.bf16.mxu0 0
    %217 = vmatpush1.bf16.msra.mxu0 0
    %218 = vmatprep.subr.bf16.mxu0 0
    %219 = vmatpush1.bf16.msra.mxu0 0
    %220 = vmatprep.subr.bf16.mxu0 0
    %221 = vmatpush1.bf16.msra.mxu0 0
    %222 = vmatprep.subr.bf16.mxu0 0
    %223 = vmatpush1.bf16.msra.mxu0 0
    %224 = vmatprep.subr.bf16.mxu0 0
    %225 = vmatpush1.bf16.msra.mxu0 0
    %226 = vmatprep.subr.bf16.mxu0 0
    %227 = vmatpush1.bf16.msra.mxu0 0
    %228 = vmatprep.mubr.bf16.mxu0 0
    %229 = vmatmul.mubr.bf16.gmra.mrb[0].mxu0 %v124
    %v230 = vpop.f32.mrb[0].mxu0
    %v231 = vadd.f32 %v146, %v230
    %v232 = vpop.f32.mrb[0].mxu0
    %v233 = vpop.f32.mrb[0].mxu0
    %v234 = vpop.f32.mrb[0].mxu0
    %235 = vdwg.mxu0
    %v236 = vxor.u32 %v231, 2147483648
    %v237 = vmul.f32 %v236, 1.442695
    %v238 = vpow.pop %v237
    %v239 = vadd.f32 %v238, 1.0
    %v240 = vrcp.pop %v239
    %v241 = vmul.f32 1.0, %v240
    %v242 = vpack.c.bf16 %v241, %v241
    %v243 = vld [vmem:[#allocation5] sm:$0xf]
    %v244 = vld [vmem:[#allocation5 + $0x4] sm:$0xf]
    %v245 = vld [vmem:[#allocation5 + $0x8] sm:$0xf]
    %v246 = vld [vmem:[#allocation5 + $0xc] sm:$0xf]
    %v247 = vld [vmem:[#allocation5 + $0x10] sm:$0xf]
    %v248 = vld [vmem:[#allocation5 + $0x14] sm:$0xf]
    %v249 = vld [vmem:[#allocation5 + $0x18] sm:$0xf]
    %v250 = vld [vmem:[#allocation5 + $0x1c] sm:$0xf]
    %v251 = vld [vmem:[#allocation5 + $0x20] sm:$0xf]
    %v252 = vld [vmem:[#allocation5 + $0x24] sm:$0xf]
    %v253 = vld [vmem:[#allocation5 + $0x28] sm:$0xf]
    %v254 = vld [vmem:[#allocation5 + $0x2c] sm:$0xf]
    %v255 = vld [vmem:[#allocation5 + $0x30] sm:$0xf]
    %v256 = vld [vmem:[#allocation5 + $0x34] sm:$0xf]
    %v257 = vld [vmem:[#allocation5 + $0x38] sm:$0xf]
    %v258 = vld [vmem:[#allocation5 + $0x3c] sm:$0xf]
    %v259 = vld [vmem:[%s6] sm:$0x1]
    %v261 = vlaneseq
    %v262 = vshrl.u32 %v261, 7
    %v263 = vsub.s32 0, %v262
    %v264 = vrot.slane %v259, %v263
    %v282 = vunpack.c.l.b16 %v243
    %v283 = vunpack.c.l.b16 %v244
    %v284 = vunpack.c.l.b16 %v245
    %v285 = vunpack.c.l.b16 %v246
    %v286 = vunpack.c.l.b16 %v247
    %v287 = vunpack.c.l.b16 %v248
    %v288 = vunpack.c.l.b16 %v249
    %v289 = vunpack.c.l.b16 %v250
    %v290 = vunpack.c.l.b16 %v251
    %v291 = vunpack.c.l.b16 %v252
    %v292 = vunpack.c.l.b16 %v253
    %v293 = vunpack.c.l.b16 %v254
    %v294 = vunpack.c.l.b16 %v255
    %v295 = vunpack.c.l.b16 %v256
    %v296 = vunpack.c.l.b16 %v257
    %v297 = vunpack.c.l.b16 %v258
    %v298 = vpack.c.b16 %v283, %v282
    %v299 = vpack.c.b16 %v285, %v284
    %v300 = vpack.c.b16 %v287, %v286
    %v301 = vpack.c.b16 %v289, %v288
    %v302 = vpack.c.b16 %v291, %v290
    %v303 = vpack.c.b16 %v293, %v292
    %v304 = vpack.c.b16 %v295, %v294
    %v305 = vpack.c.b16 %v297, %v296
    %314 = vmatprep.subr.bf16.mxu0 0
    %315 = vmatpush1.bf16.msra.mxu0 %v298
    %316 = vmatprep.subr.bf16.mxu0 0
    %317 = vmatpush1.bf16.msra.mxu0 %v299
    %318 = vmatprep.subr.bf16.mxu0 0
    %319 = vmatpush1.bf16.msra.mxu0 %v300
    %320 = vmatprep.subr.bf16.mxu0 0
    %321 = vmatpush1.bf16.msra.mxu0 %v301
    %322 = vmatprep.subr.bf16.mxu0 0
    %323 = vmatpush1.bf16.msra.mxu0 %v302
    %324 = vmatprep.subr.bf16.mxu0 0
    %325 = vmatpush1.bf16.msra.mxu0 %v303
    %326 = vmatprep.subr.bf16.mxu0 0
    %327 = vmatpush1.bf16.msra.mxu0 %v304
    %328 = vmatprep.subr.bf16.mxu0 0
    %329 = vmatpush1.bf16.msra.mxu0 %v305
    %330 = vmatprep.subr.bf16.mxu0 0
    %331 = vmatpush1.bf16.msra.mxu0 0
    %332 = vmatprep.subr.bf16.mxu0 0
    %333 = vmatpush1.bf16.msra.mxu0 0
    %334 = vmatprep.subr.bf16.mxu0 0
    %335 = vmatpush1.bf16.msra.mxu0 0
    %336 = vmatprep.subr.bf16.mxu0 0
    %337 = vmatpush1.bf16.msra.mxu0 0
    %338 = vmatprep.subr.bf16.mxu0 0
    %339 = vmatpush1.bf16.msra.mxu0 0
    %340 = vmatprep.subr.bf16.mxu0 0
    %341 = vmatpush1.bf16.msra.mxu0 0
    %342 = vmatprep.subr.bf16.mxu0 0
    %343 = vmatpush1.bf16.msra.mxu0 0
    %344 = vmatprep.subr.bf16.mxu0 0
    %345 = vmatpush1.bf16.msra.mxu0 0
    %346 = vmatprep.mubr.bf16.mxu0 0
    %347 = vmatmul.mubr.bf16.gmra.mrb[0].mxu0 %v242
    %v348 = vpop.f32.mrb[0].mxu0
    %v349 = vadd.f32 %v264, %v348
    %v350 = vpop.f32.mrb[0].mxu0
    %v351 = vpop.f32.mrb[0].mxu0
    %v352 = vpop.f32.mrb[0].mxu0
    %353 = vdwg.mxu0
    %v354 = vmax.f32 %v349, 0.0
    %v355 = vpack.c.bf16 %v354, %v354
    %v356 = vld [vmem:[%s7] sm:$0xf]
    %v357 = vld [vmem:[%s7 + $0x4] sm:$0xf]
    %v358 = vld [vmem:[%s7 + $0x8] sm:$0xf]
    %v359 = vld [vmem:[%s7 + $0xc] sm:$0xf]
    %v360 = vld [vmem:[%s7 + $0x10] sm:$0xf]
    %v361 = vld [vmem:[%s7 + $0x14] sm:$0xf]
    %v362 = vld [vmem:[%s7 + $0x18] sm:$0xf]
    %v363 = vld [vmem:[%s7 + $0x1c] sm:$0xf]
    %v364 = vld [vmem:[%s7 + $0x20] sm:$0xf]
    %v365 = vld [vmem:[%s7 + $0x24] sm:$0xf]
    %v366 = vld [vmem:[%s7 + $0x28] sm:$0xf]
    %v367 = vld [vmem:[%s7 + $0x2c] sm:$0xf]
    %v368 = vld [vmem:[%s7 + $0x30] sm:$0xf]
    %v369 = vld [vmem:[%s7 + $0x34] sm:$0xf]
    %v370 = vld [vmem:[%s7 + $0x38] sm:$0xf]
    %v371 = vld [vmem:[%s7 + $0x3c] sm:$0xf]
    %v372 = vld [vmem:[%s8] sm:$0x1]
    %v374 = vlaneseq
    %v375 = vshrl.u32 %v374, 7
    %v376 = vsub.s32 0, %v375
    %v377 = vrot.slane %v372, %v376
    %v395 = vunpack.c.l.b16 %v356
    %v396 = vunpack.c.l.b16 %v357
    %v397 = vunpack.c.l.b16 %v358
    %v398 = vunpack.c.l.b16 %v359
    %v399 = vunpack.c.l.b16 %v360
    %v400 = vunpack.c.l.b16 %v361
    %v401 = vunpack.c.l.b16 %v362
    %v402 = vunpack.c.l.b16 %v363
    %v403 = vunpack.c.l.b16 %v364
    %v404 = vunpack.c.l.b16 %v365
    %v405 = vunpack.c.l.b16 %v366
    %v406 = vunpack.c.l.b16 %v367
    %v407 = vunpack.c.l.b16 %v368
    %v408 = vunpack.c.l.b16 %v369
    %v409 = vunpack.c.l.b16 %v370
    %v410 = vunpack.c.l.b16 %v371
    %v411 = vpack.c.b16 %v396, %v395
    %v412 = vpack.c.b16 %v398, %v397
    %v413 = vpack.c.b16 %v400, %v399
    %v414 = vpack.c.b16 %v402, %v401
    %v415 = vpack.c.b16 %v404, %v403
    %v416 = vpack.c.b16 %v406, %v405
    %v417 = vpack.c.b16 %v408, %v407
    %v418 = vpack.c.b16 %v410, %v409
    %427 = vmatprep.subr.bf16.mxu0 0
    %428 = vmatpush1.bf16.msra.mxu0 %v411
    %429 = vmatprep.subr.bf16.mxu0 0
    %430 = vmatpush1.bf16.msra.mxu0 %v412
    %431 = vmatprep.subr.bf16.mxu0 0
    %432 = vmatpush1.bf16.msra.mxu0 %v413
    %433 = vmatprep.subr.bf16.mxu0 0
    %434 = vmatpush1.bf16.msra.mxu0 %v414
    %435 = vmatprep.subr.bf16.mxu0 0
    %436 = vmatpush1.bf16.msra.mxu0 %v415
    %437 = vmatprep.subr.bf16.mxu0 0
    %438 = vmatpush1.bf16.msra.mxu0 %v416
    %439 = vmatprep.subr.bf16.mxu0 0
    %440 = vmatpush1.bf16.msra.mxu0 %v417
    %441 = vmatprep.subr.bf16.mxu0 0
    %442 = vmatpush1.bf16.msra.mxu0 %v418
    %443 = vmatprep.subr.bf16.mxu0 0
    %444 = vmatpush1.bf16.msra.mxu0 0
    %445 = vmatprep.subr.bf16.mxu0 0
    %446 = vmatpush1.bf16.msra.mxu0 0
    %447 = vmatprep.subr.bf16.mxu0 0
    %448 = vmatpush1.bf16.msra.mxu0 0
    %449 = vmatprep.subr.bf16.mxu0 0
    %450 = vmatpush1.bf16.msra.mxu0 0
    %451 = vmatprep.subr.bf16.mxu0 0
    %452 = vmatpush1.bf16.msra.mxu0 0
    %453 = vmatprep.subr.bf16.mxu0 0
    %454 = vmatpush1.bf16.msra.mxu0 0
    %455 = vmatprep.subr.bf16.mxu0 0
    %456 = vmatpush1.bf16.msra.mxu0 0
    %457 = vmatprep.subr.bf16.mxu0 0
    %458 = vmatpush1.bf16.msra.mxu0 0
    %459 = vmatprep.mubr.bf16.mxu0 0
    %460 = vmatmul.mubr.bf16.gmra.mrb[0].mxu0 %v355
    %v461 = vpop.f32.mrb[0].mxu0
    %v462 = vadd.f32 %v377, %v461
    %v463 = vpop.f32.mrb[0].mxu0
    %v464 = vpop.f32.mrb[0].mxu0
    %v465 = vpop.f32.mrb[0].mxu0
    %466 = vdwg.mxu0
    %vm467 = vcmask 64512
    %468 = vst.msk [vmem:[#allocation7] sm:$0xff] %vm467, %v462
    // Predicated region
    $region46: #{tpu_custom_call.1} parent=1 // pred_check
      _
    $region47: #{tpu_custom_call.1} parent=1 // pred_check_branch
      %470 = sbr.rel (0) target = $region49
    $region48: #{tpu_custom_call.1} parent=1 // pred_region
      %s472 = ssub.s32 128, 128
      %473 = vsyncadd [#allocation4], %s472
      %s475 = sshll.u32 [#allocation7], 4
      %s476 = int_to_ptr.vmem [resolvable:$true] %s475
      %478 = dma.vmem_to_hbm [thread:$0]  %s476, 128, %s9, [#allocation4]
    $region49: #{tpu_custom_call.1} parent=1 // pred_fallthru
      _
    // Predicated region
    $region50: #{tpu_custom_call.1} parent=1 // pred_check
      _
    $region51: #{tpu_custom_call.1} parent=1 // pred_check_branch
      %480 = sbr.rel (0) target = $region53
    $region52: #{tpu_custom_call.1} parent=1 // pred_region
      %481 = dma.done [#allocation4], 128
    $region53: #{tpu_custom_call.1} parent=1 // pred_fallthru
      _
    %482 = vsyncpa [#allocation3], 1
    %483 = vsyncpa [#allocation6], 1
    %484 = vsyncpa [#allocation4], 1

</llo_original>
